<compile_context>
chip_gen: v7x
topology: tpu7x:2x2x1
jax: 0.10.0
libtpu: 0.0.40
codegen_flags: <defaults>
</compile_context>

<pallas_src>
import functools

import jax
import jax.numpy as jnp
from jax import lax
from jax.experimental import pallas as pl
from jax.experimental.pallas import tpu as pltpu


def _round_up(x, m):
    return (x + m - 1) // m * m


def _pad_axis(a, axis, target):
    pad = target - a.shape[axis]
    if pad == 0:
        return a
    widths = [(0, 0)] * a.ndim
    widths[axis] = (0, pad)
    return jnp.pad(a, widths)


def _attn_head_kernel(x_ref, wq_ref, wk_ref, wv_ref, wo_ref, o_ref, acc_ref,
                      *, n, n_p, scale):
    """One (batch, head) step of fused attention.

    x_ref:           (1, n_p, dim_p)  bf16   input activations (lane-padded)
    wq/wk/wv_ref:    (1, dim_p, d_p)  bf16   per-head projection weights
    wo_ref:          (1, d_p, dim_p)  bf16   per-head output-projection weight
    o_ref:           (1, n_p, dim_p)  f32    same block for every head
    acc_ref:         (n_p, dim_p)     f32    accumulator across the head axis
    """
    h = pl.program_id(1)

    @pl.when(h == 0)
    def _init():
        acc_ref[...] = jnp.zeros_like(acc_ref)

    x = x_ref[0]          # (n_p, dim_p) bf16
    wq = wq_ref[0]        # (dim_p, d_p) bf16
    wk = wk_ref[0]
    wv = wv_ref[0]
    wo = wo_ref[0]        # (d_p, dim_p) bf16

    # Per-head projections on the MXU, f32 accumulation.
    q = jnp.dot(x, wq, preferred_element_type=jnp.float32)   # (n_p, d_p)
    k = jnp.dot(x, wk, preferred_element_type=jnp.float32)
    v = jnp.dot(x, wv, preferred_element_type=jnp.float32)

    # Fold the softmax scale into q (cheap O(n*d) VPU pass, not O(n^2) on dots).
    q = (q * scale).astype(jnp.bfloat16)
    k = k.astype(jnp.bfloat16)

    # scores[i, j] = q[i, :] . k[j, :]   -> (n_p, n_p) f32
    dots = lax.dot_general(q, k, (((1,), (1,)), ((), ())),
                           preferred_element_type=jnp.float32)

    if n_p != n:  # static branch: mask padded key positions
        col = lax.broadcasted_iota(jnp.int32, (n_p, n_p), 1)
        dots = jnp.where(col < n, dots, -1e30)

    # Numerically stable softmax in f32; normalize via EUP approx reciprocal.
    m = jnp.max(dots, axis=-1, keepdims=True)
    e = jnp.exp(dots - m)
    denom = jnp.sum(e, axis=-1, keepdims=True)
    attn = e * pl.reciprocal(denom, approx=True)

    # out_h = attn @ v ; per-head contribution to y = out_h @ W_out[h]
    out_h = jnp.dot(attn.astype(jnp.bfloat16), v.astype(jnp.bfloat16),
                    preferred_element_type=jnp.float32)        # (n_p, d_p)
    contrib = jnp.dot(out_h.astype(jnp.bfloat16), wo,
                      preferred_element_type=jnp.float32)      # (n_p, dim_p)

    acc_ref[...] += contrib

    @pl.when(h == pl.num_programs(1) - 1)
    def _finalize():
        o_ref[0] = acc_ref[...].astype(o_ref.dtype)


def attention_forward(x, w_qkv, w_out, heads):
    """Fused multi-head attention.  w_qkv: (dim, 3*inner), w_out: (inner, dim)."""
    out_dtype = x.dtype
    b, n, dim = x.shape
    inner = w_qkv.shape[1] // 3
    d = inner // heads
    scale = float(d) ** -0.5

    # Lane/sublane padding targets so every VMEM operand is (8, 128)-dense.
    dim_p = _round_up(dim, 128)
    d_p = _round_up(d, 128)
    n_p = _round_up(n, 8)

    # Split the fused QKV weight into per-head lane-dense projections
    # (removes all non-128-aligned lane slicing inside the kernel).
    def per_head(w):  # (dim, inner) -> (heads, dim_p, d_p) bf16
        w = w.reshape(dim, heads, d).transpose(1, 0, 2)
        return _pad_axis(_pad_axis(w, 1, dim_p), 2, d_p).astype(jnp.bfloat16)

    w_q = per_head(w_qkv[:, 0 * inner:1 * inner])
    w_k = per_head(w_qkv[:, 1 * inner:2 * inner])
    w_v = per_head(w_qkv[:, 2 * inner:3 * inner])

    w_o = w_out.reshape(heads, d, dim)                          # (heads, d, dim)
    w_o = _pad_axis(_pad_axis(w_o, 1, d_p), 2, dim_p).astype(jnp.bfloat16)

    x_p = _pad_axis(_pad_axis(x, 1, n_p), 2, dim_p).astype(jnp.bfloat16)

    kernel = functools.partial(_attn_head_kernel, n=n, n_p=n_p, scale=scale)

    y_p = pl.pallas_call(
        kernel,
        out_shape=jax.ShapeDtypeStruct((b, n_p, dim_p), jnp.float32),
        grid=(b, heads),
        in_specs=[
            pl.BlockSpec((1, n_p, dim_p), lambda bi, hi: (bi, 0, 0)),
            pl.BlockSpec((1, dim_p, d_p), lambda bi, hi: (hi, 0, 0)),
            pl.BlockSpec((1, dim_p, d_p), lambda bi, hi: (hi, 0, 0)),
            pl.BlockSpec((1, dim_p, d_p), lambda bi, hi: (hi, 0, 0)),
            pl.BlockSpec((1, d_p, dim_p), lambda bi, hi: (hi, 0, 0)),
        ],
        out_specs=pl.BlockSpec((1, n_p, dim_p), lambda bi, hi: (bi, 0, 0)),
        scratch_shapes=[pltpu.VMEM((n_p, dim_p), jnp.float32)],
        compiler_params=pltpu.CompilerParams(
            dimension_semantics=("parallel", "arbitrary")),
    )(x_p, w_q, w_k, w_v, w_o)

    return y_p[:, :n, :dim].astype(out_dtype)


def attention_reference(x, w_qkv, w_out, heads):
    """Pure-JAX fp32 reference mirroring the PyTorch forward."""
    b, n, dim = x.shape
    inner = w_qkv.shape[1] // 3
    d = inner // heads
    scale = float(d) ** -0.5

    qkv = x @ w_qkv
    q, k, v = jnp.split(qkv, 3, axis=-1)

    def to_heads(t):
        return t.reshape(b, n, heads, d).transpose(0, 2, 1, 3)  # b h n d

    q, k, v = map(to_heads, (q, k, v))
    dots = jnp.einsum('bhid,bhjd->bhij', q, k) * scale
    attn = jax.nn.softmax(dots, axis=-1)
    out = jnp.einsum('bhij,bhjd->bhid', attn, v)
    out = out.transpose(0, 2, 1, 3).reshape(b, n, inner)
    return out @ w_out


if __name__ == "__main__":
    # Small shapes consistent with the module's forward:
    #   x: (batch=2, seq=8, dim=32), heads=4, dim_head=16 -> inner_dim=64.
    B, N, DIM = 2, 8, 32
    HEADS, DIM_HEAD = 4, 16
    INNER = HEADS * DIM_HEAD

    key = jax.random.PRNGKey(0)
    kx, kqkv, kout = jax.random.split(key, 3)

    x = jax.random.normal(kx, (B, N, DIM), dtype=jnp.float32)
    # Deterministic init ~ nn.Linear default uniform(-1/sqrt(in), 1/sqrt(in)),
    # stored transposed as (in, out).
    w_qkv = jax.random.uniform(kqkv, (DIM, 3 * INNER), jnp.float32,
                               minval=-1.0, maxval=1.0) / (DIM ** 0.5)
    w_out = jax.random.uniform(kout, (INNER, DIM), jnp.float32,
                               minval=-1.0, maxval=1.0) / (INNER ** 0.5)

    y = attention_forward(x, w_qkv, w_out, HEADS)
    y = jax.block_until_ready(y)

    y_ref = attention_reference(x, w_qkv, w_out, HEADS)
    assert y.shape == (B, N, DIM)
    # bf16 MXU inputs + approx reciprocal -> modest tolerance vs fp32 reference.
    assert jnp.allclose(y, y_ref, rtol=2e-2, atol=2e-2), "mismatch vs reference"

    print("KERNEL_OK")
</pallas_src>

<mosaic_0001>
module attributes {stable_mosaic.version = 11 : i64} {
  func.func @_attn_head_kernel(%arg0: i32, %arg1: i32, %arg2: memref<1x8x128xbf16, #tpu.memory_space<vmem>>, %arg3: memref<1x128x128xbf16, #tpu.memory_space<vmem>>, %arg4: memref<1x128x128xbf16, #tpu.memory_space<vmem>>, %arg5: memref<1x128x128xbf16, #tpu.memory_space<vmem>>, %arg6: memref<1x128x128xbf16, #tpu.memory_space<vmem>>, %arg7: memref<1x8x128xf32, #tpu.memory_space<vmem>>, %arg8: memref<8x128xf32, #tpu.memory_space<vmem>>) attributes {dimension_semantics = [#tpu.dimension_semantics<parallel>, #tpu.dimension_semantics<arbitrary>], iteration_bounds = array<i64: 2, 4>, scalar_prefetch = 0 : i64, scratch_operands = 1 : i64, tpu.core_type = #tpu.core_type<tc>, window_params = [{transform_indices = @transform_0, window_bounds = array<i64: 1, 8, 128>}, {transform_indices = @transform_1, window_bounds = array<i64: 1, 128, 128>}, {transform_indices = @transform_2, window_bounds = array<i64: 1, 128, 128>}, {transform_indices = @transform_3, window_bounds = array<i64: 1, 128, 128>}, {transform_indices = @transform_4, window_bounds = array<i64: 1, 128, 128>}, {transform_indices = @transform_5, window_bounds = array<i64: 1, 8, 128>}]} {
    %c0_i32 = arith.constant 0 : i32
    %0 = arith.cmpi eq, %arg1, %c0_i32 : i32
    %1 = arith.extui %0 : i1 to i32
    %c0_i32_0 = arith.constant 0 : i32
    %2 = arith.cmpi ne, %1, %c0_i32_0 : i32
    scf.if %2 {
      %cst_28 = arith.constant 0.000000e+00 : f32
      %42 = vector.broadcast %cst_28 : f32 to vector<8x128xf32>
      %c0_29 = arith.constant 0 : index
      %c0_30 = arith.constant 0 : index
      %43 = vector.load %arg8[%c0_29, %c0_30] : memref<8x128xf32, #tpu.memory_space<vmem>>, vector<8x128xf32>
      tpu.vector_store %arg8[%c0_29, %c0_30], %42 {strides = array<i32>} : memref<8x128xf32, #tpu.memory_space<vmem>>, vector<8x128xf32>,
    } else {
    }
    %c0 = arith.constant 0 : index
    %c0_1 = arith.constant 0 : index
    %c0_2 = arith.constant 0 : index
    %3 = vector.load %arg2[%c0, %c0_1, %c0_2] : memref<1x8x128xbf16, #tpu.memory_space<vmem>>, vector<1x8x128xbf16>
    %4 = vector.shape_cast %3 : vector<1x8x128xbf16> to vector<8x128xbf16>
    %c0_3 = arith.constant 0 : index
    %c0_4 = arith.constant 0 : index
    %c0_5 = arith.constant 0 : index
    %5 = vector.load %arg3[%c0_3, %c0_4, %c0_5] : memref<1x128x128xbf16, #tpu.memory_space<vmem>>, vector<1x128x128xbf16>
    %6 = vector.shape_cast %5 : vector<1x128x128xbf16> to vector<128x128xbf16>
    %c0_6 = arith.constant 0 : index
    %c0_7 = arith.constant 0 : index
    %c0_8 = arith.constant 0 : index
    %7 = vector.load %arg4[%c0_6, %c0_7, %c0_8] : memref<1x128x128xbf16, #tpu.memory_space<vmem>>, vector<1x128x128xbf16>
    %8 = vector.shape_cast %7 : vector<1x128x128xbf16> to vector<128x128xbf16>
    %c0_9 = arith.constant 0 : index
    %c0_10 = arith.constant 0 : index
    %c0_11 = arith.constant 0 : index
    %9 = vector.load %arg5[%c0_9, %c0_10, %c0_11] : memref<1x128x128xbf16, #tpu.memory_space<vmem>>, vector<1x128x128xbf16>
    %10 = vector.shape_cast %9 : vector<1x128x128xbf16> to vector<128x128xbf16>
    %c0_12 = arith.constant 0 : index
    %c0_13 = arith.constant 0 : index
    %c0_14 = arith.constant 0 : index
    %11 = vector.load %arg6[%c0_12, %c0_13, %c0_14] : memref<1x128x128xbf16, #tpu.memory_space<vmem>>, vector<1x128x128xbf16>
    %12 = vector.shape_cast %11 : vector<1x128x128xbf16> to vector<128x128xbf16>
    %cst = arith.constant dense<0.000000e+00> : vector<8x128xf32>
    %13 = tpu.matmul %4, %6, %cst {dimension_numbers = #tpu.dot_dimension_numbers<[1], [0], [0], [1], [0, 0, 1, 1], [], []>} : vector<8x128xbf16>, vector<128x128xbf16>, vector<8x128xf32> -> vector<8x128xf32>
    %cst_15 = arith.constant dense<0.000000e+00> : vector<8x128xf32>
    %14 = tpu.matmul %4, %8, %cst_15 {dimension_numbers = #tpu.dot_dimension_numbers<[1], [0], [0], [1], [0, 0, 1, 1], [], []>} : vector<8x128xbf16>, vector<128x128xbf16>, vector<8x128xf32> -> vector<8x128xf32>
    %cst_16 = arith.constant dense<0.000000e+00> : vector<8x128xf32>
    %15 = tpu.matmul %4, %10, %cst_16 {dimension_numbers = #tpu.dot_dimension_numbers<[1], [0], [0], [1], [0, 0, 1, 1], [], []>} : vector<8x128xbf16>, vector<128x128xbf16>, vector<8x128xf32> -> vector<8x128xf32>
    %cst_17 = arith.constant 2.500000e-01 : f32
    %16 = vector.broadcast %cst_17 : f32 to vector<8x128xf32>
    %17 = arith.mulf %13, %16 : vector<8x128xf32>
    %18 = arith.truncf %17 : vector<8x128xf32> to vector<8x128xbf16>
    %19 = arith.truncf %14 : vector<8x128xf32> to vector<8x128xbf16>
    %cst_18 = arith.constant dense<0.000000e+00> : vector<8x8xf32>
    %20 = tpu.matmul %18, %19, %cst_18 {dimension_numbers = #tpu.dot_dimension_numbers<[1], [1], [0], [0], [0, 0, 1, 0], [], []>} : vector<8x128xbf16>, vector<8x128xbf16>, vector<8x8xf32> -> vector<8x8xf32>
    %cst_19 = arith.constant dense<0xFF800000> : vector<8xf32>
    %21 = vector.multi_reduction <maximumf>, %20, %cst_19 [1] : vector<8x8xf32> to vector<8xf32>
    %22 = vector.shape_cast %21 : vector<8xf32> to vector<8x1xf32>
    %23 = vector.broadcast %22 : vector<8x1xf32> to vector<8x8xf32>
    %24 = arith.subf %20, %23 : vector<8x8xf32>
    %25 = math.exp %24 : vector<8x8xf32>
    %cst_20 = arith.constant dense<0.000000e+00> : vector<8xf32>
    %26 = vector.multi_reduction <add>, %25, %cst_20 [1] : vector<8x8xf32> to vector<8xf32>
    %27 = vector.shape_cast %26 : vector<8xf32> to vector<8x1xf32>
    %28 = tpu.reciprocal %27 {approx = true} : vector<8x1xf32> -> vector<8x1xf32>
    %29 = vector.broadcast %28 : vector<8x1xf32> to vector<8x8xf32>
    %30 = arith.mulf %25, %29 : vector<8x8xf32>
    %31 = arith.truncf %30 : vector<8x8xf32> to vector<8x8xbf16>
    %32 = arith.truncf %15 : vector<8x128xf32> to vector<8x128xbf16>
    %cst_21 = arith.constant dense<0.000000e+00> : vector<8x128xf32>
    %33 = tpu.matmul %31, %32, %cst_21 {dimension_numbers = #tpu.dot_dimension_numbers<[1], [0], [0], [1], [0, 0, 1, 1], [], []>} : vector<8x8xbf16>, vector<8x128xbf16>, vector<8x128xf32> -> vector<8x128xf32>
    %34 = arith.truncf %33 : vector<8x128xf32> to vector<8x128xbf16>
    %cst_22 = arith.constant dense<0.000000e+00> : vector<8x128xf32>
    %35 = tpu.matmul %34, %12, %cst_22 {dimension_numbers = #tpu.dot_dimension_numbers<[1], [0], [0], [1], [0, 0, 1, 1], [], []>} : vector<8x128xbf16>, vector<128x128xbf16>, vector<8x128xf32> -> vector<8x128xf32>
    %c0_23 = arith.constant 0 : index
    %c0_24 = arith.constant 0 : index
    %36 = vector.load %arg8[%c0_23, %c0_24] : memref<8x128xf32, #tpu.memory_space<vmem>>, vector<8x128xf32>
    %37 = arith.addf %36, %35 : vector<8x128xf32>
    %c0_25 = arith.constant 0 : index
    %c0_26 = arith.constant 0 : index
    %38 = vector.load %arg8[%c0_25, %c0_26] : memref<8x128xf32, #tpu.memory_space<vmem>>, vector<8x128xf32>
    tpu.vector_store %arg8[%c0_25, %c0_26], %37 {strides = array<i32>} : memref<8x128xf32, #tpu.memory_space<vmem>>, vector<8x128xf32>,
    %c3_i32 = arith.constant 3 : i32
    %39 = arith.cmpi eq, %arg1, %c3_i32 : i32
    %40 = arith.extui %39 : i1 to i32
    %c0_i32_27 = arith.constant 0 : i32
    %41 = arith.cmpi ne, %40, %c0_i32_27 : i32
    scf.if %41 {
      %c0_28 = arith.constant 0 : index
      %c0_29 = arith.constant 0 : index
      %42 = vector.load %arg8[%c0_28, %c0_29] : memref<8x128xf32, #tpu.memory_space<vmem>>, vector<8x128xf32>
      %c0_30 = arith.constant 0 : index
      %c0_31 = arith.constant 0 : index
      %c0_32 = arith.constant 0 : index
      %43 = vector.load %arg7[%c0_30, %c0_31, %c0_32] : memref<1x8x128xf32, #tpu.memory_space<vmem>>, vector<1x8x128xf32>
      %44 = vector.shape_cast %43 : vector<1x8x128xf32> to vector<8x128xf32>
      %45 = vector.shape_cast %42 : vector<8x128xf32> to vector<1x8x128xf32>
      tpu.vector_store %arg7[%c0_30, %c0_31, %c0_32], %45 {strides = array<i32>} : memref<1x8x128xf32, #tpu.memory_space<vmem>>, vector<1x8x128xf32>,
    } else {
    }
    return
  }
  func.func @transform_0(%arg0: i32, %arg1: i32) -> (i32, i32, i32) {
    %c0_i32 = arith.constant 0 : i32
    %c0_i32_0 = arith.constant 0 : i32
    %c0_i32_1 = arith.constant 0 : i32
    return %arg0, %c0_i32, %c0_i32_0 : i32, i32, i32
  }
  func.func @transform_1(%arg0: i32, %arg1: i32) -> (i32, i32, i32) {
    %c0_i32 = arith.constant 0 : i32
    %c0_i32_0 = arith.constant 0 : i32
    %c0_i32_1 = arith.constant 0 : i32
    return %arg1, %c0_i32, %c0_i32_0 : i32, i32, i32
  }
  func.func @transform_2(%arg0: i32, %arg1: i32) -> (i32, i32, i32) {
    %c0_i32 = arith.constant 0 : i32
    %c0_i32_0 = arith.constant 0 : i32
    %c0_i32_1 = arith.constant 0 : i32
    return %arg1, %c0_i32, %c0_i32_0 : i32, i32, i32
  }
  func.func @transform_3(%arg0: i32, %arg1: i32) -> (i32, i32, i32) {
    %c0_i32 = arith.constant 0 : i32
    %c0_i32_0 = arith.constant 0 : i32
    %c0_i32_1 = arith.constant 0 : i32
    return %arg1, %c0_i32, %c0_i32_0 : i32, i32, i32
  }
  func.func @transform_4(%arg0: i32, %arg1: i32) -> (i32, i32, i32) {
    %c0_i32 = arith.constant 0 : i32
    %c0_i32_0 = arith.constant 0 : i32
    %c0_i32_1 = arith.constant 0 : i32
    return %arg1, %c0_i32, %c0_i32_0 : i32, i32, i32
  }
  func.func @transform_5(%arg0: i32, %arg1: i32) -> (i32, i32, i32) {
    %c0_i32 = arith.constant 0 : i32
    %c0_i32_0 = arith.constant 0 : i32
    %c0_i32_1 = arith.constant 0 : i32
    return %arg0, %c0_i32, %c0_i32_0 : i32, i32, i32
  }
}

</mosaic_0001>

<llo_original>
// kernel: tpu_custom_call.1
$region0: #{tpu_custom_call.1}
  #allocation0 [shape = 'u32[]', space=smem, size = 0x4, offset = 0x4, fixed_abs, tag = 'smem constant byte address 0x4 - core index']
  #allocation1 [shape = 'u32[144,128]{1,0:T(1,128)}', space=vmem, size = 0x12000, scoped, tag = 'internal scratch']
  #allocation2 [shape = 'f32[8,128]{1,0:T(8,128)}', space=vmem, size = 0x1000, scoped, tag = 'scratch operand']
  %s0 = inlined_call_operand.hbm [shape: bf16[2,8,128], index: 0, kind: input, shape index: {}]
  %s1 = inlined_call_operand.hbm [shape: bf16[4,128,128], index: 1, kind: input, shape index: {}]
  %s2 = inlined_call_operand.hbm [shape: bf16[4,128,128], index: 2, kind: input, shape index: {}]
  %s3 = inlined_call_operand.hbm [shape: bf16[4,128,128], index: 3, kind: input, shape index: {}]
  %s4 = inlined_call_operand.hbm [shape: bf16[4,128,128], index: 4, kind: input, shape index: {}]
  %s5 = inlined_call_operand.hbm [shape: f32[2,8,128], index: 5, kind: output, shape index: {}]
  %s6 = sld [smem:[#allocation0]]
  $region81: #{tpu_custom_call.1} parent=0
    _
  %s8 = ssub.s32 1, %s6
  %s9 = scalar_select 0, %s8, %s6
  $region1: #{tpu_custom_call.1} parent=0
    #allocation3 [shape = 'u8[4096]{0}', space=vmem, size = 0x1000, scoped, tag = 'input window, operand 0']
    #allocation4 [shape = 's32[2]{0}', space=sflag, size = 0x8, scoped, tag = 'scoped memory for tpu_custom_call.1']
    #allocation5 [shape = 's32[2]{0}', space=sflag, size = 0x8, scoped, tag = 'scoped memory for tpu_custom_call.1']
    #allocation6 [shape = 'u8[65536]{0}', space=vmem, size = 0x10000, scoped, tag = 'input window, operand 1']
    #allocation7 [shape = 's32[2]{0}', space=sflag, size = 0x8, scoped, tag = 'scoped memory for tpu_custom_call.1']
    #allocation8 [shape = 'u8[65536]{0}', space=vmem, size = 0x10000, scoped, tag = 'input window, operand 2']
    #allocation9 [shape = 'u8[65536]{0}', space=vmem, size = 0x10000, scoped, tag = 'input window, operand 3']
    #allocation10 [shape = 's32[2]{0}', space=sflag, size = 0x8, scoped, tag = 'scoped memory for tpu_custom_call.1']
    #allocation11 [shape = 'u8[65536]{0}', space=vmem, size = 0x10000, scoped, tag = 'input window, operand 4']
    #allocation12 [shape = 'u8[8192]{0}', space=vmem, size = 0x2000, scoped, tag = 'output window, operand 0']
    %10 = vsyncpa [#allocation4], 0
    %s11 = scalar_lea.sflag [#allocation4], 1
    %12 = vsyncpa %s11, 0
    %13 = vsyncpa [#allocation7], 0
    %s14 = scalar_lea.sflag [#allocation7], 1
    %15 = vsyncpa %s14, 0
    %16 = vsyncpa [#allocation10], 0
    %s17 = scalar_lea.sflag [#allocation10], 1
    %18 = vsyncpa %s17, 0
    %19 = vsyncpa [#allocation5], 0
    %s20 = scalar_lea.sflag [#allocation5], 1
    %21 = vsyncpa %s20, 0
    loop: start=0, step=1, limit=10
    $region2: #{tpu_custom_call.1} parent=1 // loop_pre_header
      _
    $region3: #{tpu_custom_call.1} parent=1 // loop_header
      %s23 = sphi 0, %s27
      %p24 = scmp.ge.s32.totalorder %s23, 10
      %s30 = sphi 0, %s42
      %s31 = sphi 0, %s38
      %s32 = sphi 0, %s30
      %s33 = sphi 0, %s31
      %s34 = sphi 0, %s32
      %s35 = sphi 0, %s33
      %s45 = sphi 0, %s47
      %s48 = sphi 0, %s45
      %s49 = sphi 0, %s48
      %s65 = sphi 0, %s49
      %s71 = sphi 0, %s73
      %s74 = sphi 0, %s71
      %s75 = sphi 0, %s74
      %s91 = sphi 0, %s75
      %s97 = sphi 0, %s99
      %s100 = sphi 0, %s97
      %s101 = sphi 0, %s100
      %s117 = sphi 0, %s101
      %s123 = sphi 0, %s125
      %s126 = sphi 0, %s123
      %s127 = sphi 0, %s126
      %s143 = sphi 0, %s127
      %s149 = sphi 0, %s151
      %s152 = sphi 0, %s149
      %s153 = sphi 0, %s152
      %s169 = sphi 0, %s153
      %s175 = sphi 0, %s177
      %s178 = sphi 0, %s175
      %s179 = sphi 0, %s178
      %s195 = sphi 0, %s179
    $region4: #{tpu_custom_call.1} parent=1 // loop_header_branch
      %26 = sbr.rel (%p24) target = $region8
    $region5: #{tpu_custom_call.1} parent=1 // loop_body
      %s28 = ssub.s32 %s23, 1
      %s29 = ssub.s32 %s23, 2
      %s36 = sadd.s32 1, %s31
      %p37 = scmp.ge.s32.totalorder %s36, 4
      %s38 = scalar_select %p37, 0, %s36
      %s39 = sadd.s32 1, %s30
      %s40 = scalar_select %p37, %s39, %s30
      %p41 = scmp.ge.s32.totalorder %s40, 2
      %s42 = scalar_select %p41, 0, %s40
      %s43 = ssub.s32 %s30, %s42
      %p44 = scmp.eq.s32.totalorder %s43, 0
      %s46 = sadd.s32 %s45, 1
      %s47 = scalar_select %p44, %s45, %s46
      %p50 = pneg %p44
      %p51 = scmp.eq.s32.totalorder %s23, 7
      %p52 = por %p50, %p51
      %p53 = scmp.ne.s32.totalorder %s45, %s48
      %p54 = scmp.eq.s32.totalorder %s23, 0
      %p55 = por %p53, %p54
      %p56 = scmp.ne.s32.totalorder %s45, %s48
      %p57 = scmp.eq.s32.totalorder %s28, 7
      %p58 = por %p56, %p57
      %p59 = scmp.ne.s32.totalorder %s48, %s49
      %p60 = scmp.eq.s32.totalorder %s28, 0
      %p61 = por %p59, %p60
      %p62 = scmp.ne.s32.totalorder %s48, %s49
      %p63 = scmp.eq.s32.totalorder %s29, 7
      %p64 = por %p62, %p63
      %p66 = scmp.ne.s32.totalorder %s49, %s65
      %p67 = scmp.eq.s32.totalorder %s29, 0
      %p68 = por %p66, %p67
      %s69 = ssub.s32 %s31, %s38
      %p70 = scmp.eq.s32.totalorder %s69, 0
      %s72 = sadd.s32 %s71, 1
      %s73 = scalar_select %p70, %s71, %s72
      %p76 = pneg %p70
      %p77 = scmp.eq.s32.totalorder %s23, 7
      %p78 = por %p76, %p77
      %p79 = scmp.ne.s32.totalorder %s71, %s74
      %p80 = scmp.eq.s32.totalorder %s23, 0
      %p81 = por %p79, %p80
      %p82 = scmp.ne.s32.totalorder %s71, %s74
      %p83 = scmp.eq.s32.totalorder %s28, 7
      %p84 = por %p82, %p83
      %p85 = scmp.ne.s32.totalorder %s74, %s75
      %p86 = scmp.eq.s32.totalorder %s28, 0
      %p87 = por %p85, %p86
      %p88 = scmp.ne.s32.totalorder %s74, %s75
      %p89 = scmp.eq.s32.totalorder %s29, 7
      %p90 = por %p88, %p89
      %p92 = scmp.ne.s32.totalorder %s75, %s91
      %p93 = scmp.eq.s32.totalorder %s29, 0
      %p94 = por %p92, %p93
      %s95 = ssub.s32 %s31, %s38
      %p96 = scmp.eq.s32.totalorder %s95, 0
      %s98 = sadd.s32 %s97, 1
      %s99 = scalar_select %p96, %s97, %s98
      %p102 = pneg %p96
      %p103 = scmp.eq.s32.totalorder %s23, 7
      %p104 = por %p102, %p103
      %p105 = scmp.ne.s32.totalorder %s97, %s100
      %p106 = scmp.eq.s32.totalorder %s23, 0
      %p107 = por %p105, %p106
      %p108 = scmp.ne.s32.totalorder %s97, %s100
      %p109 = scmp.eq.s32.totalorder %s28, 7
      %p110 = por %p108, %p109
      %p111 = scmp.ne.s32.totalorder %s100, %s101
      %p112 = scmp.eq.s32.totalorder %s28, 0
      %p113 = por %p111, %p112
      %p114 = scmp.ne.s32.totalorder %s100, %s101
      %p115 = scmp.eq.s32.totalorder %s29, 7
      %p116 = por %p114, %p115
      %p118 = scmp.ne.s32.totalorder %s101, %s117
      %p119 = scmp.eq.s32.totalorder %s29, 0
      %p120 = por %p118, %p119
      %s121 = ssub.s32 %s31, %s38
      %p122 = scmp.eq.s32.totalorder %s121, 0
      %s124 = sadd.s32 %s123, 1
      %s125 = scalar_select %p122, %s123, %s124
      %p128 = pneg %p122
      %p129 = scmp.eq.s32.totalorder %s23, 7
      %p130 = por %p128, %p129
      %p131 = scmp.ne.s32.totalorder %s123, %s126
      %p132 = scmp.eq.s32.totalorder %s23, 0
      %p133 = por %p131, %p132
      %p134 = scmp.ne.s32.totalorder %s123, %s126
      %p135 = scmp.eq.s32.totalorder %s28, 7
      %p136 = por %p134, %p135
      %p137 = scmp.ne.s32.totalorder %s126, %s127
      %p138 = scmp.eq.s32.totalorder %s28, 0
      %p139 = por %p137, %p138
      %p140 = scmp.ne.s32.totalorder %s126, %s127
      %p141 = scmp.eq.s32.totalorder %s29, 7
      %p142 = por %p140, %p141
      %p144 = scmp.ne.s32.totalorder %s127, %s143
      %p145 = scmp.eq.s32.totalorder %s29, 0
      %p146 = por %p144, %p145
      %s147 = ssub.s32 %s31, %s38
      %p148 = scmp.eq.s32.totalorder %s147, 0
      %s150 = sadd.s32 %s149, 1
      %s151 = scalar_select %p148, %s149, %s150
      %p154 = pneg %p148
      %p155 = scmp.eq.s32.totalorder %s23, 7
      %p156 = por %p154, %p155
      %p157 = scmp.ne.s32.totalorder %s149, %s152
      %p158 = scmp.eq.s32.totalorder %s23, 0
      %p159 = por %p157, %p158
      %p160 = scmp.ne.s32.totalorder %s149, %s152
      %p161 = scmp.eq.s32.totalorder %s28, 7
      %p162 = por %p160, %p161
      %p163 = scmp.ne.s32.totalorder %s152, %s153
      %p164 = scmp.eq.s32.totalorder %s28, 0
      %p165 = por %p163, %p164
      %p166 = scmp.ne.s32.totalorder %s152, %s153
      %p167 = scmp.eq.s32.totalorder %s29, 7
      %p168 = por %p166, %p167
      %p170 = scmp.ne.s32.totalorder %s153, %s169
      %p171 = scmp.eq.s32.totalorder %s29, 0
      %p172 = por %p170, %p171
      %s173 = ssub.s32 %s30, %s42
      %p174 = scmp.eq.s32.totalorder %s173, 0
      %s176 = sadd.s32 %s175, 1
      %s177 = scalar_select %p174, %s175, %s176
      %p180 = pneg %p174
      %p181 = scmp.eq.s32.totalorder %s23, 7
      %p182 = por %p180, %p181
      %p183 = scmp.ne.s32.totalorder %s175, %s178
      %p184 = scmp.eq.s32.totalorder %s23, 0
      %p185 = por %p183, %p184
      %p186 = scmp.ne.s32.totalorder %s175, %s178
      %p187 = scmp.eq.s32.totalorder %s28, 7
      %p188 = por %p186, %p187
      %p189 = scmp.ne.s32.totalorder %s178, %s179
      %p190 = scmp.eq.s32.totalorder %s28, 0
      %p191 = por %p189, %p190
      %p192 = scmp.ne.s32.totalorder %s178, %s179
      %p193 = scmp.eq.s32.totalorder %s29, 7
      %p194 = por %p192, %p193
      %p196 = scmp.ne.s32.totalorder %s179, %s195
      %p197 = scmp.eq.s32.totalorder %s29, 0
      %p198 = por %p196, %p197
      %p199 = scmp.le.s32.totalorder 1, %s23
      %p200 = scmp.lt.s32.totalorder %s23, 9
      %p201 = pnand %p199, %p200
      %p202 = pneg %p201
      // Predicated region
      $region9: #{tpu_custom_call.1} parent=5 // pred_check
        _
      $region10: #{tpu_custom_call.1} parent=5 // pred_check_branch
        %204 = sbr.rel (%p201) target = $region12
      $region11: #{tpu_custom_call.1} parent=5 // pred_region
        %s205 = ssub.s32 %s23, 1
      $region12: #{tpu_custom_call.1} parent=5 // pred_fallthru
        _
      %p206 = scmp.lt.s32.totalorder %s23, 8
      // Predicated region
      $region13: #{tpu_custom_call.1} parent=5 // pred_check
        %p207 = pneg %p206
      $region14: #{tpu_custom_call.1} parent=5 // pred_check_branch
        %209 = sbr.rel (%p207) target = $region16
      $region15: #{tpu_custom_call.1} parent=5 // pred_region
        // Predicated region
        $region17: #{tpu_custom_call.1} parent=15 // pred_check
          %p210 = pneg %p55
        $region18: #{tpu_custom_call.1} parent=15 // pred_check_branch
          %212 = sbr.rel (%p210) target = $region20
        $region19: #{tpu_custom_call.1} parent=15 // pred_region
          %s213 = sand.u32 %s45, 1
          %s214 = scalar_lea.sflag [#allocation4], %s213
          %s215 = sand.u32 %s45, 1
          %s216 = smul.addr %s215, 4
          %s217 = scalar_lea.vmem [#allocation3], %s216
          %s219 = ssub.s32 64, 64
          %220 = vsyncadd %s214, %s219
          %s221 = smul.addr %s30, 64
          %s222 = scalar_lea.hbm %s0, %s221
          %s224 = sshll.u32 %s217, 4
          %s225 = int_to_ptr.vmem [resolvable:$true] %s224
          %227 = dma.hbm_to_vmem [thread:$0]  %s222, 64, %s225, %s214
        $region20: #{tpu_custom_call.1} parent=15 // pred_fallthru
          _
        // Predicated region
        $region21: #{tpu_custom_call.1} parent=15 // pred_check
          %p228 = pneg %p81
        $region22: #{tpu_custom_call.1} parent=15 // pred_check_branch
          %230 = sbr.rel (%p228) target = $region24
        $region23: #{tpu_custom_call.1} parent=15 // pred_region
          %s231 = sand.u32 %s23, 1
          %s232 = scalar_lea.sflag [#allocation7], %s231
          %s233 = sand.u32 %s71, 1
          %s234 = smul.addr %s233, 64
          %s235 = scalar_lea.vmem [#allocation6], %s234
          %s237 = ssub.s32 1024, 1024
          %238 = vsyncadd %s232, %s237
          %s239 = smul.addr %s31, 16
          %s240 = smul.addr %s239, 64
          %s241 = scalar_lea.hbm %s1, %s240
          %s242 = sshll.u32 %s235, 4
          %s243 = int_to_ptr.vmem [resolvable:$true] %s242
          %248 = dma.hbm_to_vmem [thread:$0]  %s241, 1024, %s243, %s232, 64, 64, 4
        $region24: #{tpu_custom_call.1} parent=15 // pred_fallthru
          _
        // Predicated region
        $region25: #{tpu_custom_call.1} parent=15 // pred_check
          %p249 = pneg %p107
        $region26: #{tpu_custom_call.1} parent=15 // pred_check_branch
          %251 = sbr.rel (%p249) target = $region28
        $region27: #{tpu_custom_call.1} parent=15 // pred_region
          %s252 = sand.u32 %s23, 1
          %s253 = scalar_lea.sflag [#allocation7], %s252
          %s254 = sand.u32 %s97, 1
          %s255 = smul.addr %s254, 64
          %s256 = scalar_lea.vmem [#allocation8], %s255
          %s258 = ssub.s32 1024, 1024
          %259 = vsyncadd %s253, %s258
          %s260 = smul.addr %s31, 16
          %s261 = smul.addr %s260, 64
          %s262 = scalar_lea.hbm %s2, %s261
          %s263 = sshll.u32 %s256, 4
          %s264 = int_to_ptr.vmem [resolvable:$true] %s263
          %269 = dma.hbm_to_vmem [thread:$0]  %s262, 1024, %s264, %s253, 64, 64, 4
        $region28: #{tpu_custom_call.1} parent=15 // pred_fallthru
          _
        // Predicated region
        $region29: #{tpu_custom_call.1} parent=15 // pred_check
          %p270 = pneg %p133
        $region30: #{tpu_custom_call.1} parent=15 // pred_check_branch
          %272 = sbr.rel (%p270) target = $region32
        $region31: #{tpu_custom_call.1} parent=15 // pred_region
          %s273 = sand.u32 %s23, 1
          %s274 = scalar_lea.sflag [#allocation10], %s273
          %s275 = sand.u32 %s123, 1
          %s276 = smul.addr %s275, 64
          %s277 = scalar_lea.vmem [#allocation9], %s276
          %s279 = ssub.s32 1024, 1024
          %280 = vsyncadd %s274, %s279
          %s281 = smul.addr %s31, 16
          %s282 = smul.addr %s281, 64
          %s283 = scalar_lea.hbm %s3, %s282
          %s284 = sshll.u32 %s277, 4
          %s285 = int_to_ptr.vmem [resolvable:$true] %s284
          %290 = dma.hbm_to_vmem [thread:$0]  %s283, 1024, %s285, %s274, 64, 64, 4
        $region32: #{tpu_custom_call.1} parent=15 // pred_fallthru
          _
        // Predicated region
        $region33: #{tpu_custom_call.1} parent=15 // pred_check
          %p291 = pneg %p159
        $region34: #{tpu_custom_call.1} parent=15 // pred_check_branch
          %293 = sbr.rel (%p291) target = $region36
        $region35: #{tpu_custom_call.1} parent=15 // pred_region
          %s294 = sand.u32 %s23, 1
          %s295 = scalar_lea.sflag [#allocation10], %s294
          %s296 = sand.u32 %s149, 1
          %s297 = smul.addr %s296, 64
          %s298 = scalar_lea.vmem [#allocation11], %s297
          %s300 = ssub.s32 1024, 1024
          %301 = vsyncadd %s295, %s300
          %s302 = smul.addr %s31, 16
          %s303 = smul.addr %s302, 64
          %s304 = scalar_lea.hbm %s4, %s303
          %s305 = sshll.u32 %s298, 4
          %s306 = int_to_ptr.vmem [resolvable:$true] %s305
          %311 = dma.hbm_to_vmem [thread:$0]  %s304, 1024, %s306, %s295, 64, 64, 4
        $region36: #{tpu_custom_call.1} parent=15 // pred_fallthru
          _
      $region16: #{tpu_custom_call.1} parent=5 // pred_fallthru
        _
      %p312 = scmp.le.s32.totalorder 1, %s23
      %p313 = scmp.lt.s32.totalorder %s23, 9
      %p314 = pnand %p312, %p313
      %p315 = pneg %p314
      // Predicated region
      $region37: #{tpu_custom_call.1} parent=5 // pred_check
        _
      $region38: #{tpu_custom_call.1} parent=5 // pred_check_branch
        %317 = sbr.rel (%p314) target = $region40
      $region39: #{tpu_custom_call.1} parent=5 // pred_region
        %s318 = ssub.s32 %s23, 1
        %s319 = sand.u32 %s48, 1
        %s320 = scalar_lea.sflag [#allocation4], %s319
        %s321 = sand.u32 %s48, 1
        %s322 = smul.addr %s321, 4
        %s323 = scalar_lea.vmem [#allocation3], %s322
        // Predicated region
        $region41: #{tpu_custom_call.1} parent=39 // pred_check
          %p324 = pneg %p61
        $region42: #{tpu_custom_call.1} parent=39 // pred_check_branch
          %326 = sbr.rel (%p324) target = $region44
        $region43: #{tpu_custom_call.1} parent=39 // pred_region
          %327 = dma.done %s320, 64
        $region44: #{tpu_custom_call.1} parent=39 // pred_fallthru
          _
        %s328 = sand.u32 %s28, 1
        %s329 = scalar_lea.sflag [#allocation7], %s328
        %s330 = sand.u32 %s74, 1
        %s331 = smul.addr %s330, 64
        %s332 = scalar_lea.vmem [#allocation6], %s331
        // Predicated region
        $region45: #{tpu_custom_call.1} parent=39 // pred_check
          %p333 = pneg %p87
        $region46: #{tpu_custom_call.1} parent=39 // pred_check_branch
          %335 = sbr.rel (%p333) target = $region48
        $region47: #{tpu_custom_call.1} parent=39 // pred_region
          %336 = dma.done %s329, 1024
        $region48: #{tpu_custom_call.1} parent=39 // pred_fallthru
          _
        %s337 = sand.u32 %s28, 1
        %s338 = scalar_lea.sflag [#allocation7], %s337
        %s339 = sand.u32 %s100, 1
        %s340 = smul.addr %s339, 64
        %s341 = scalar_lea.vmem [#allocation8], %s340
        // Predicated region
        $region49: #{tpu_custom_call.1} parent=39 // pred_check
          %p342 = pneg %p113
        $region50: #{tpu_custom_call.1} parent=39 // pred_check_branch
          %344 = sbr.rel (%p342) target = $region52
        $region51: #{tpu_custom_call.1} parent=39 // pred_region
          %345 = dma.done %s338, 1024
        $region52: #{tpu_custom_call.1} parent=39 // pred_fallthru
          _
        %s346 = sand.u32 %s28, 1
        %s347 = scalar_lea.sflag [#allocation10], %s346
        %s348 = sand.u32 %s126, 1
        %s349 = smul.addr %s348, 64
        %s350 = scalar_lea.vmem [#allocation9], %s349
        // Predicated region
        $region53: #{tpu_custom_call.1} parent=39 // pred_check
          %p351 = pneg %p139
        $region54: #{tpu_custom_call.1} parent=39 // pred_check_branch
          %353 = sbr.rel (%p351) target = $region56
        $region55: #{tpu_custom_call.1} parent=39 // pred_region
          %354 = dma.done %s347, 1024
        $region56: #{tpu_custom_call.1} parent=39 // pred_fallthru
          _
        %s355 = sand.u32 %s28, 1
        %s356 = scalar_lea.sflag [#allocation10], %s355
        %s357 = sand.u32 %s152, 1
        %s358 = smul.addr %s357, 64
        %s359 = scalar_lea.vmem [#allocation11], %s358
        // Predicated region
        $region57: #{tpu_custom_call.1} parent=39 // pred_check
          %p360 = pneg %p165
        $region58: #{tpu_custom_call.1} parent=39 // pred_check_branch
          %362 = sbr.rel (%p360) target = $region60
        $region59: #{tpu_custom_call.1} parent=39 // pred_region
          %363 = dma.done %s356, 1024
        $region60: #{tpu_custom_call.1} parent=39 // pred_fallthru
          _
        %s364 = sand.u32 %s48, 1
        %s365 = scalar_lea.sflag [#allocation4], %s364
        %s366 = sand.u32 %s48, 1
        %s367 = smul.addr %s366, 4
        %s368 = scalar_lea.vmem [#allocation3], %s367
        %p369 = pneg %p61
        %p370 = pneg %p58
        %s371 = sand.u32 %s28, 1
        %s372 = scalar_lea.sflag [#allocation7], %s371
        %s373 = sand.u32 %s74, 1
        %s374 = smul.addr %s373, 64
        %s375 = scalar_lea.vmem [#allocation6], %s374
        %p376 = pneg %p87
        %p377 = pneg %p84
        %s378 = sand.u32 %s28, 1
        %s379 = scalar_lea.sflag [#allocation7], %s378
        %s380 = sand.u32 %s100, 1
        %s381 = smul.addr %s380, 64
        %s382 = scalar_lea.vmem [#allocation8], %s381
        %p383 = pneg %p113
        %p384 = pneg %p110
        %s385 = sand.u32 %s28, 1
        %s386 = scalar_lea.sflag [#allocation10], %s385
        %s387 = sand.u32 %s126, 1
        %s388 = smul.addr %s387, 64
        %s389 = scalar_lea.vmem [#allocation9], %s388
        %p390 = pneg %p139
        %p391 = pneg %p136
        %s392 = sand.u32 %s28, 1
        %s393 = scalar_lea.sflag [#allocation10], %s392
        %s394 = sand.u32 %s152, 1
        %s395 = smul.addr %s394, 64
        %s396 = scalar_lea.vmem [#allocation11], %s395
        %p397 = pneg %p165
        %p398 = pneg %p162
        %p399 = pneg %p191
        %p400 = pneg %p188
        %s401 = sand.u32 %s178, 1
        %s402 = scalar_lea.sflag [#allocation5], %s401
        %s403 = sand.u32 %s178, 1
        %s404 = smul.addr %s403, 8
        %s405 = scalar_lea.vmem [#allocation12], %s404
        %p407 = scmp.eq.s32.totalorder %s33, 0
        // Predicated region
        $region61: #{tpu_custom_call.1} parent=39 // pred_check
          %p408 = pneg %p407
        $region62: #{tpu_custom_call.1} parent=39 // pred_check_branch
          %410 = sbr.rel (%p408) target = $region64
        $region63: #{tpu_custom_call.1} parent=39 // pred_region
          %411 = vst [vmem:[#allocation2] sm:$0xff] 0.0
        $region64: #{tpu_custom_call.1} parent=39 // pred_fallthru
          _
        %v412 = vld [vmem:[%s323] sm:$0xf]
        %v413 = vld [vmem:[%s332] sm:$0xf]
        %v414 = vld [vmem:[%s332 + $0x4] sm:$0xf]
        %v415 = vld [vmem:[%s332 + $0x8] sm:$0xf]
        %v416 = vld [vmem:[%s332 + $0xc] sm:$0xf]
        %v417 = vld [vmem:[%s332 + $0x10] sm:$0xf]
        %v418 = vld [vmem:[%s332 + $0x14] sm:$0xf]
        %v419 = vld [vmem:[%s332 + $0x18] sm:$0xf]
        %v420 = vld [vmem:[%s332 + $0x1c] sm:$0xf]
        %v421 = vld [vmem:[%s332 + $0x20] sm:$0xf]
        %v422 = vld [vmem:[%s332 + $0x24] sm:$0xf]
        %v423 = vld [vmem:[%s332 + $0x28] sm:$0xf]
        %v424 = vld [vmem:[%s332 + $0x2c] sm:$0xf]
        %v425 = vld [vmem:[%s332 + $0x30] sm:$0xf]
        %v426 = vld [vmem:[%s332 + $0x34] sm:$0xf]
        %v427 = vld [vmem:[%s332 + $0x38] sm:$0xf]
        %v428 = vld [vmem:[%s332 + $0x3c] sm:$0xf]
        %v429 = vld [vmem:[%s341] sm:$0xf]
        %v430 = vld [vmem:[%s341 + $0x4] sm:$0xf]
        %v431 = vld [vmem:[%s341 + $0x8] sm:$0xf]
        %v432 = vld [vmem:[%s341 + $0xc] sm:$0xf]
        %v433 = vld [vmem:[%s341 + $0x10] sm:$0xf]
        %v434 = vld [vmem:[%s341 + $0x14] sm:$0xf]
        %v435 = vld [vmem:[%s341 + $0x18] sm:$0xf]
        %v436 = vld [vmem:[%s341 + $0x1c] sm:$0xf]
        %v437 = vld [vmem:[%s341 + $0x20] sm:$0xf]
        %v438 = vld [vmem:[%s341 + $0x24] sm:$0xf]
        %v439 = vld [vmem:[%s341 + $0x28] sm:$0xf]
        %v440 = vld [vmem:[%s341 + $0x2c] sm:$0xf]
        %v441 = vld [vmem:[%s341 + $0x30] sm:$0xf]
        %v442 = vld [vmem:[%s341 + $0x34] sm:$0xf]
        %v443 = vld [vmem:[%s341 + $0x38] sm:$0xf]
        %v444 = vld [vmem:[%s341 + $0x3c] sm:$0xf]
        %v445 = vld [vmem:[%s350] sm:$0xf]
        %v446 = vld [vmem:[%s350 + $0x4] sm:$0xf]
        %v447 = vld [vmem:[%s350 + $0x8] sm:$0xf]
        %v448 = vld [vmem:[%s350 + $0xc] sm:$0xf]
        %v449 = vld [vmem:[%s350 + $0x10] sm:$0xf]
        %v450 = vld [vmem:[%s350 + $0x14] sm:$0xf]
        %v451 = vld [vmem:[%s350 + $0x18] sm:$0xf]
        %v452 = vld [vmem:[%s350 + $0x1c] sm:$0xf]
        %v453 = vld [vmem:[%s350 + $0x20] sm:$0xf]
        %v454 = vld [vmem:[%s350 + $0x24] sm:$0xf]
        %v455 = vld [vmem:[%s350 + $0x28] sm:$0xf]
        %v456 = vld [vmem:[%s350 + $0x2c] sm:$0xf]
        %v457 = vld [vmem:[%s350 + $0x30] sm:$0xf]
        %v458 = vld [vmem:[%s350 + $0x34] sm:$0xf]
        %v459 = vld [vmem:[%s350 + $0x38] sm:$0xf]
        %v460 = vld [vmem:[%s350 + $0x3c] sm:$0xf]
        %v461 = vld [vmem:[%s359] sm:$0xf]
        %v462 = vld [vmem:[%s359 + $0x4] sm:$0xf]
        %v463 = vld [vmem:[%s359 + $0x8] sm:$0xf]
        %v464 = vld [vmem:[%s359 + $0xc] sm:$0xf]
        %v465 = vld [vmem:[%s359 + $0x10] sm:$0xf]
        %v466 = vld [vmem:[%s359 + $0x14] sm:$0xf]
        %v467 = vld [vmem:[%s359 + $0x18] sm:$0xf]
        %v468 = vld [vmem:[%s359 + $0x1c] sm:$0xf]
        %v469 = vld [vmem:[%s359 + $0x20] sm:$0xf]
        %v470 = vld [vmem:[%s359 + $0x24] sm:$0xf]
        %v471 = vld [vmem:[%s359 + $0x28] sm:$0xf]
        %v472 = vld [vmem:[%s359 + $0x2c] sm:$0xf]
        %v473 = vld [vmem:[%s359 + $0x30] sm:$0xf]
        %v474 = vld [vmem:[%s359 + $0x34] sm:$0xf]
        %v475 = vld [vmem:[%s359 + $0x38] sm:$0xf]
        %v476 = vld [vmem:[%s359 + $0x3c] sm:$0xf]
        %v493 = vunpack.c.l.b16 %v413
        %v494 = vunpack.c.l.b16 %v414
        %v495 = vunpack.c.l.b16 %v415
        %v496 = vunpack.c.l.b16 %v416
        %v497 = vunpack.c.l.b16 %v417
        %v498 = vunpack.c.l.b16 %v418
        %v499 = vunpack.c.l.b16 %v419
        %v500 = vunpack.c.l.b16 %v420
        %v501 = vunpack.c.l.b16 %v421
        %v502 = vunpack.c.l.b16 %v422
        %v503 = vunpack.c.l.b16 %v423
        %v504 = vunpack.c.l.b16 %v424
        %v505 = vunpack.c.l.b16 %v425
        %v506 = vunpack.c.l.b16 %v426
        %v507 = vunpack.c.l.b16 %v427
        %v508 = vunpack.c.l.b16 %v428
        %v509 = vpack.c.b16 %v494, %v493
        %v510 = vpack.c.b16 %v496, %v495
        %v511 = vpack.c.b16 %v498, %v497
        %v512 = vpack.c.b16 %v500, %v499
        %v513 = vpack.c.b16 %v502, %v501
        %v514 = vpack.c.b16 %v504, %v503
        %v515 = vpack.c.b16 %v506, %v505
        %v516 = vpack.c.b16 %v508, %v507
        %525 = vmatprep.subr.bf16.mxu0 0
        %526 = vmatpush1.bf16.msra.mxu0 %v509
        %527 = vmatprep.subr.bf16.mxu0 0
        %528 = vmatpush1.bf16.msra.mxu0 %v510
        %529 = vmatprep.subr.bf16.mxu0 0
        %530 = vmatpush1.bf16.msra.mxu0 %v511
        %531 = vmatprep.subr.bf16.mxu0 0
        %532 = vmatpush1.bf16.msra.mxu0 %v512
        %533 = vmatprep.subr.bf16.mxu0 0
        %534 = vmatpush1.bf16.msra.mxu0 %v513
        %535 = vmatprep.subr.bf16.mxu0 0
        %536 = vmatpush1.bf16.msra.mxu0 %v514
        %537 = vmatprep.subr.bf16.mxu0 0
        %538 = vmatpush1.bf16.msra.mxu0 %v515
        %539 = vmatprep.subr.bf16.mxu0 0
        %540 = vmatpush1.bf16.msra.mxu0 %v516
        %541 = vmatprep.subr.bf16.mxu0 0
        %542 = vmatpush1.bf16.msra.mxu0 0
        %543 = vmatprep.subr.bf16.mxu0 0
        %544 = vmatpush1.bf16.msra.mxu0 0
        %545 = vmatprep.subr.bf16.mxu0 0
        %546 = vmatpush1.bf16.msra.mxu0 0
        %547 = vmatprep.subr.bf16.mxu0 0
        %548 = vmatpush1.bf16.msra.mxu0 0
        %549 = vmatprep.subr.bf16.mxu0 0
        %550 = vmatpush1.bf16.msra.mxu0 0
        %551 = vmatprep.subr.bf16.mxu0 0
        %552 = vmatpush1.bf16.msra.mxu0 0
        %553 = vmatprep.subr.bf16.mxu0 0
        %554 = vmatpush1.bf16.msra.mxu0 0
        %555 = vmatprep.subr.bf16.mxu0 0
        %556 = vmatpush1.bf16.msra.mxu0 0
        %557 = vmatprep.mubr.bf16.mxu0 0
        %558 = vmatmul.mubr.bf16.gmra.mrb[0].mxu0 %v412
        %v559 = vpop.f32.mrb[0].mxu0
        %v560 = vadd.f32 0.0, %v559
        %v561 = vpop.f32.mrb[0].mxu0
        %v562 = vpop.f32.mrb[0].mxu0
        %v563 = vpop.f32.mrb[0].mxu0
        %564 = vdwg.mxu0
        %v581 = vunpack.c.l.b16 %v429
        %v582 = vunpack.c.l.b16 %v430
        %v583 = vunpack.c.l.b16 %v431
        %v584 = vunpack.c.l.b16 %v432
        %v585 = vunpack.c.l.b16 %v433
        %v586 = vunpack.c.l.b16 %v434
        %v587 = vunpack.c.l.b16 %v435
        %v588 = vunpack.c.l.b16 %v436
        %v589 = vunpack.c.l.b16 %v437
        %v590 = vunpack.c.l.b16 %v438
        %v591 = vunpack.c.l.b16 %v439
        %v592 = vunpack.c.l.b16 %v440
        %v593 = vunpack.c.l.b16 %v441
        %v594 = vunpack.c.l.b16 %v442
        %v595 = vunpack.c.l.b16 %v443
        %v596 = vunpack.c.l.b16 %v444
        %v597 = vpack.c.b16 %v582, %v581
        %v598 = vpack.c.b16 %v584, %v583
        %v599 = vpack.c.b16 %v586, %v585
        %v600 = vpack.c.b16 %v588, %v587
        %v601 = vpack.c.b16 %v590, %v589
        %v602 = vpack.c.b16 %v592, %v591
        %v603 = vpack.c.b16 %v594, %v593
        %v604 = vpack.c.b16 %v596, %v595
        %613 = vmatprep.subr.bf16.mxu0 0
        %614 = vmatpush1.bf16.msra.mxu0 %v597
        %615 = vmatprep.subr.bf16.mxu0 0
        %616 = vmatpush1.bf16.msra.mxu0 %v598
        %617 = vmatprep.subr.bf16.mxu0 0
        %618 = vmatpush1.bf16.msra.mxu0 %v599
        %619 = vmatprep.subr.bf16.mxu0 0
        %620 = vmatpush1.bf16.msra.mxu0 %v600
        %621 = vmatprep.subr.bf16.mxu0 0
        %622 = vmatpush1.bf16.msra.mxu0 %v601
        %623 = vmatprep.subr.bf16.mxu0 0
        %624 = vmatpush1.bf16.msra.mxu0 %v602
        %625 = vmatprep.subr.bf16.mxu0 0
        %626 = vmatpush1.bf16.msra.mxu0 %v603
        %627 = vmatprep.subr.bf16.mxu0 0
        %628 = vmatpush1.bf16.msra.mxu0 %v604
        %629 = vmatprep.subr.bf16.mxu0 0
        %630 = vmatpush1.bf16.msra.mxu0 0
        %631 = vmatprep.subr.bf16.mxu0 0
        %632 = vmatpush1.bf16.msra.mxu0 0
        %633 = vmatprep.subr.bf16.mxu0 0
        %634 = vmatpush1.bf16.msra.mxu0 0
        %635 = vmatprep.subr.bf16.mxu0 0
        %636 = vmatpush1.bf16.msra.mxu0 0
        %637 = vmatprep.subr.bf16.mxu0 0
        %638 = vmatpush1.bf16.msra.mxu0 0
        %639 = vmatprep.subr.bf16.mxu0 0
        %640 = vmatpush1.bf16.msra.mxu0 0
        %641 = vmatprep.subr.bf16.mxu0 0
        %642 = vmatpush1.bf16.msra.mxu0 0
        %643 = vmatprep.subr.bf16.mxu0 0
        %644 = vmatpush1.bf16.msra.mxu0 0
        %645 = vmatprep.mubr.bf16.mxu0 0
        %646 = vmatmul.mubr.bf16.gmra.mrb[0].mxu0 %v412
        %v647 = vpop.f32.mrb[0].mxu0
        %v648 = vadd.f32 0.0, %v647
        %v649 = vpop.f32.mrb[0].mxu0
        %v650 = vpop.f32.mrb[0].mxu0
        %v651 = vpop.f32.mrb[0].mxu0
        %652 = vdwg.mxu0
        %v669 = vunpack.c.l.b16 %v445
        %v670 = vunpack.c.l.b16 %v446
        %v671 = vunpack.c.l.b16 %v447
        %v672 = vunpack.c.l.b16 %v448
        %v673 = vunpack.c.l.b16 %v449
        %v674 = vunpack.c.l.b16 %v450
        %v675 = vunpack.c.l.b16 %v451
        %v676 = vunpack.c.l.b16 %v452
        %v677 = vunpack.c.l.b16 %v453
        %v678 = vunpack.c.l.b16 %v454
        %v679 = vunpack.c.l.b16 %v455
        %v680 = vunpack.c.l.b16 %v456
        %v681 = vunpack.c.l.b16 %v457
        %v682 = vunpack.c.l.b16 %v458
        %v683 = vunpack.c.l.b16 %v459
        %v684 = vunpack.c.l.b16 %v460
        %v685 = vpack.c.b16 %v670, %v669
        %v686 = vpack.c.b16 %v672, %v671
        %v687 = vpack.c.b16 %v674, %v673
        %v688 = vpack.c.b16 %v676, %v675
        %v689 = vpack.c.b16 %v678, %v677
        %v690 = vpack.c.b16 %v680, %v679
        %v691 = vpack.c.b16 %v682, %v681
        %v692 = vpack.c.b16 %v684, %v683
        %701 = vmatprep.subr.bf16.mxu0 0
        %702 = vmatpush1.bf16.msra.mxu0 %v685
        %703 = vmatprep.subr.bf16.mxu0 0
        %704 = vmatpush1.bf16.msra.mxu0 %v686
        %705 = vmatprep.subr.bf16.mxu0 0
        %706 = vmatpush1.bf16.msra.mxu0 %v687
        %707 = vmatprep.subr.bf16.mxu0 0
        %708 = vmatpush1.bf16.msra.mxu0 %v688
        %709 = vmatprep.subr.bf16.mxu0 0
        %710 = vmatpush1.bf16.msra.mxu0 %v689
        %711 = vmatprep.subr.bf16.mxu0 0
        %712 = vmatpush1.bf16.msra.mxu0 %v690
        %713 = vmatprep.subr.bf16.mxu0 0
        %714 = vmatpush1.bf16.msra.mxu0 %v691
        %715 = vmatprep.subr.bf16.mxu0 0
        %716 = vmatpush1.bf16.msra.mxu0 %v692
        %717 = vmatprep.subr.bf16.mxu0 0
        %718 = vmatpush1.bf16.msra.mxu0 0
        %719 = vmatprep.subr.bf16.mxu0 0
        %720 = vmatpush1.bf16.msra.mxu0 0
        %721 = vmatprep.subr.bf16.mxu0 0
        %722 = vmatpush1.bf16.msra.mxu0 0
        %723 = vmatprep.subr.bf16.mxu0 0
        %724 = vmatpush1.bf16.msra.mxu0 0
        %725 = vmatprep.subr.bf16.mxu0 0
        %726 = vmatpush1.bf16.msra.mxu0 0
        %727 = vmatprep.subr.bf16.mxu0 0
        %728 = vmatpush1.bf16.msra.mxu0 0
        %729 = vmatprep.subr.bf16.mxu0 0
        %730 = vmatpush1.bf16.msra.mxu0 0
        %731 = vmatprep.subr.bf16.mxu0 0
        %732 = vmatpush1.bf16.msra.mxu0 0
        %733 = vmatprep.mubr.bf16.mxu0 0
        %734 = vmatmul.mubr.bf16.gmra.mrb[0].mxu0 %v412
        %v735 = vpop.f32.mrb[0].mxu0
        %v736 = vadd.f32 0.0, %v735
        %v737 = vpop.f32.mrb[0].mxu0
        %v738 = vpop.f32.mrb[0].mxu0
        %v739 = vpop.f32.mrb[0].mxu0
        %740 = vdwg.mxu0
        %v741 = vmul.f32 %v560, 0.25
        %v742 = vpack.c.bf16 %v741, %v741
        %v743 = vpack.c.bf16 %v648, %v648
        %744 = vmatprep.subr.bf16.mxu0 0
        %745 = vmatpush1.bf16.xpose.msra.mxu0 %v743
        %746 = vmatprep.subr.bf16.mxu0 0
        %747 = vmatpush1.bf16.xpose.msra.mxu0 0
        %748 = vmatprep.subr.bf16.mxu0 0
        %749 = vmatpush1.bf16.xpose.msra.mxu0 0
        %750 = vmatprep.subr.bf16.mxu0 0
        %751 = vmatpush1.bf16.xpose.msra.mxu0 0
        %752 = vmatprep.subr.bf16.mxu0 0
        %753 = vmatpush1.bf16.xpose.msra.mxu0 0
        %754 = vmatprep.subr.bf16.mxu0 0
        %755 = vmatpush1.bf16.xpose.msra.mxu0 0
        %756 = vmatprep.subr.bf16.mxu0 0
        %757 = vmatpush1.bf16.xpose.msra.mxu0 0
        %758 = vmatprep.subr.bf16.mxu0 0
        %759 = vmatpush1.bf16.xpose.msra.mxu0 0
        %760 = vmatprep.subr.bf16.mxu0 0
        %761 = vmatpush1.bf16.xpose.msra.mxu0 0
        %762 = vmatprep.subr.bf16.mxu0 0
        %763 = vmatpush1.bf16.xpose.msra.mxu0 0
        %764 = vmatprep.subr.bf16.mxu0 0
        %765 = vmatpush1.bf16.xpose.msra.mxu0 0
        %766 = vmatprep.subr.bf16.mxu0 0
        %767 = vmatpush1.bf16.xpose.msra.mxu0 0
        %768 = vmatprep.subr.bf16.mxu0 0
        %769 = vmatpush1.bf16.xpose.msra.mxu0 0
        %770 = vmatprep.subr.bf16.mxu0 0
        %771 = vmatpush1.bf16.xpose.msra.mxu0 0
        %772 = vmatprep.subr.bf16.mxu0 0
        %773 = vmatpush1.bf16.xpose.msra.mxu0 0
        %774 = vmatprep.subr.bf16.mxu0 0
        %775 = vmatpush1.bf16.xpose.msra.mxu0 0
        %776 = vmatprep.mubr.bf16.mxu0 0
        %777 = vmatmul.mubr.bf16.gmra.mrb[0].mxu0 %v742
        %v778 = vpop.f32.mrb[0].mxu0
        %v779 = vadd.f32 0.0, %v778
        %v780 = vpop.f32.mrb[0].mxu0
        %v781 = vpop.f32.mrb[0].mxu0
        %v782 = vpop.f32.mrb[0].mxu0
        %783 = vdwg.mxu0
        %vm784 = vcmask 64512
        %v785 = vsel %vm784, %v779, -inf
        %786 = vmax.xlane.f32.xlu0 %v785
        %v787 = vpop.xlane.xlu0 %786
        %v788 = vsub.f32 %v779, %v787
        %v789 = vmul.f32 %v788, 1.442695
        %v790 = vpow.pop %v789
        %v791 = vsel %vm784, %v790, 0.0
        %792 = vadd.xlane.f32.xlu0 %v791
        %v793 = vpop.xlane.xlu0 %792
        %v794 = vrcp.pop %v793
        %v795 = vmul.f32 %v790, %v794
        %v796 = vpack.c.bf16 %v795, %v795
        %v797 = vpack.c.bf16 %v736, %v736
        %v799 = vsel %vm784, %v796, 0
        %vm801 = vcmask 1043456
        %v803 = vsel %vm801, %v797, 0
        %805 = vmatprep.subr.bf16.mxu0 0
        %806 = vmatpush1.bf16.msra.mxu0 %v803
        %807 = vmatprep.subr.bf16.mxu0 0
        %808 = vmatpush1.bf16.msra.mxu0 0
        %809 = vmatprep.subr.bf16.mxu0 0
        %810 = vmatpush1.bf16.msra.mxu0 0
        %811 = vmatprep.subr.bf16.mxu0 0
        %812 = vmatpush1.bf16.msra.mxu0 0
        %813 = vmatprep.subr.bf16.mxu0 0
        %814 = vmatpush1.bf16.msra.mxu0 0
        %815 = vmatprep.subr.bf16.mxu0 0
        %816 = vmatpush1.bf16.msra.mxu0 0
        %817 = vmatprep.subr.bf16.mxu0 0
        %818 = vmatpush1.bf16.msra.mxu0 0
        %819 = vmatprep.subr.bf16.mxu0 0
        %820 = vmatpush1.bf16.msra.mxu0 0
        %821 = vmatprep.subr.bf16.mxu0 0
        %822 = vmatpush1.bf16.msra.mxu0 0
        %823 = vmatprep.subr.bf16.mxu0 0
        %824 = vmatpush1.bf16.msra.mxu0 0
        %825 = vmatprep.subr.bf16.mxu0 0
        %826 = vmatpush1.bf16.msra.mxu0 0
        %827 = vmatprep.subr.bf16.mxu0 0
        %828 = vmatpush1.bf16.msra.mxu0 0
        %829 = vmatprep.subr.bf16.mxu0 0
        %830 = vmatpush1.bf16.msra.mxu0 0
        %831 = vmatprep.subr.bf16.mxu0 0
        %832 = vmatpush1.bf16.msra.mxu0 0
        %833 = vmatprep.subr.bf16.mxu0 0
        %834 = vmatpush1.bf16.msra.mxu0 0
        %835 = vmatprep.subr.bf16.mxu0 0
        %836 = vmatpush1.bf16.msra.mxu0 0
        %837 = vmatprep.mubr.bf16.mxu0 0
        %838 = vmatmul.mubr.bf16.gmra.mrb[0].mxu0 %v799
        %v839 = vpop.f32.mrb[0].mxu0
        %v840 = vadd.f32 0.0, %v839
        %v841 = vpop.f32.mrb[0].mxu0
        %v842 = vpop.f32.mrb[0].mxu0
        %v843 = vpop.f32.mrb[0].mxu0
        %844 = vdwg.mxu0
        %v845 = vpack.c.bf16 %v840, %v840
        %v862 = vunpack.c.l.b16 %v461
        %v863 = vunpack.c.l.b16 %v462
        %v864 = vunpack.c.l.b16 %v463
        %v865 = vunpack.c.l.b16 %v464
        %v866 = vunpack.c.l.b16 %v465
        %v867 = vunpack.c.l.b16 %v466
        %v868 = vunpack.c.l.b16 %v467
        %v869 = vunpack.c.l.b16 %v468
        %v870 = vunpack.c.l.b16 %v469
        %v871 = vunpack.c.l.b16 %v470
        %v872 = vunpack.c.l.b16 %v471
        %v873 = vunpack.c.l.b16 %v472
        %v874 = vunpack.c.l.b16 %v473
        %v875 = vunpack.c.l.b16 %v474
        %v876 = vunpack.c.l.b16 %v475
        %v877 = vunpack.c.l.b16 %v476
        %v878 = vpack.c.b16 %v863, %v862
        %v879 = vpack.c.b16 %v865, %v864
        %v880 = vpack.c.b16 %v867, %v866
        %v881 = vpack.c.b16 %v869, %v868
        %v882 = vpack.c.b16 %v871, %v870
        %v883 = vpack.c.b16 %v873, %v872
        %v884 = vpack.c.b16 %v875, %v874
        %v885 = vpack.c.b16 %v877, %v876
        %894 = vmatprep.subr.bf16.mxu0 0
        %895 = vmatpush1.bf16.msra.mxu0 %v878
        %896 = vmatprep.subr.bf16.mxu0 0
        %897 = vmatpush1.bf16.msra.mxu0 %v879
        %898 = vmatprep.subr.bf16.mxu0 0
        %899 = vmatpush1.bf16.msra.mxu0 %v880
        %900 = vmatprep.subr.bf16.mxu0 0
        %901 = vmatpush1.bf16.msra.mxu0 %v881
        %902 = vmatprep.subr.bf16.mxu0 0
        %903 = vmatpush1.bf16.msra.mxu0 %v882
        %904 = vmatprep.subr.bf16.mxu0 0
        %905 = vmatpush1.bf16.msra.mxu0 %v883
        %906 = vmatprep.subr.bf16.mxu0 0
        %907 = vmatpush1.bf16.msra.mxu0 %v884
        %908 = vmatprep.subr.bf16.mxu0 0
        %909 = vmatpush1.bf16.msra.mxu0 %v885
        %910 = vmatprep.subr.bf16.mxu0 0
        %911 = vmatpush1.bf16.msra.mxu0 0
        %912 = vmatprep.subr.bf16.mxu0 0
        %913 = vmatpush1.bf16.msra.mxu0 0
        %914 = vmatprep.subr.bf16.mxu0 0
        %915 = vmatpush1.bf16.msra.mxu0 0
        %916 = vmatprep.subr.bf16.mxu0 0
        %917 = vmatpush1.bf16.msra.mxu0 0
        %918 = vmatprep.subr.bf16.mxu0 0
        %919 = vmatpush1.bf16.msra.mxu0 0
        %920 = vmatprep.subr.bf16.mxu0 0
        %921 = vmatpush1.bf16.msra.mxu0 0
        %922 = vmatprep.subr.bf16.mxu0 0
        %923 = vmatpush1.bf16.msra.mxu0 0
        %924 = vmatprep.subr.bf16.mxu0 0
        %925 = vmatpush1.bf16.msra.mxu0 0
        %926 = vmatprep.mubr.bf16.mxu0 0
        %927 = vmatmul.mubr.bf16.gmra.mrb[0].mxu0 %v845
        %v928 = vpop.f32.mrb[0].mxu0
        %v929 = vadd.f32 0.0, %v928
        %v930 = vpop.f32.mrb[0].mxu0
        %v931 = vpop.f32.mrb[0].mxu0
        %v932 = vpop.f32.mrb[0].mxu0
        %933 = vdwg.mxu0
        %v934 = vld [vmem:[#allocation2] sm:$0xff]
        %v935 = vadd.f32 %v934, %v929
        %936 = vst [vmem:[#allocation2] sm:$0xff] %v935
        %p937 = scmp.eq.s32.totalorder %s33, 3
        // Predicated region
        $region65: #{tpu_custom_call.1} parent=39 // pred_check
          %p938 = pneg %p937
        $region66: #{tpu_custom_call.1} parent=39 // pred_check_branch
          %940 = sbr.rel (%p938) target = $region68
        $region67: #{tpu_custom_call.1} parent=39 // pred_region
          %v941 = vld [vmem:[#allocation2] sm:$0xff]
          %942 = vst [vmem:[%s405] sm:$0xff] %v941
        $region68: #{tpu_custom_call.1} parent=39 // pred_fallthru
          _
        %s943 = sand.u32 %s178, 1
        %s944 = scalar_lea.sflag [#allocation5], %s943
        %s945 = sand.u32 %s178, 1
        %s946 = smul.addr %s945, 8
        %s947 = scalar_lea.vmem [#allocation12], %s946
        // Predicated region
        $region69: #{tpu_custom_call.1} parent=39 // pred_check
          %p948 = pneg %p188
        $region70: #{tpu_custom_call.1} parent=39 // pred_check_branch
          %950 = sbr.rel (%p948) target = $region72
        $region71: #{tpu_custom_call.1} parent=39 // pred_region
          %s952 = ssub.s32 128, 128
          %953 = vsyncadd %s944, %s952
          %s954 = smul.addr %s32, 128
          %s955 = scalar_lea.hbm %s5, %s954
          %s957 = sshll.u32 %s947, 4
          %s958 = int_to_ptr.vmem [resolvable:$true] %s957
          %960 = dma.vmem_to_hbm [thread:$0]  %s958, 128, %s955, %s944
        $region72: #{tpu_custom_call.1} parent=39 // pred_fallthru
          _
      $region40: #{tpu_custom_call.1} parent=5 // pred_fallthru
        _
      %p961 = scmp.le.s32.totalorder 2, %s23
      // Predicated region
      $region73: #{tpu_custom_call.1} parent=5 // pred_check
        %p962 = pneg %p961
      $region74: #{tpu_custom_call.1} parent=5 // pred_check_branch
        %964 = sbr.rel (%p962) target = $region76
      $region75: #{tpu_custom_call.1} parent=5 // pred_region
        %s965 = ssub.s32 %s23, 2
        // Predicated region
        $region77: #{tpu_custom_call.1} parent=75 // pred_check
          %p966 = pneg %p194
        $region78: #{tpu_custom_call.1} parent=75 // pred_check_branch
          %968 = sbr.rel (%p966) target = $region80
        $region79: #{tpu_custom_call.1} parent=75 // pred_region
          %s969 = sand.u32 %s179, 1
          %s970 = scalar_lea.sflag [#allocation5], %s969
          %s971 = sand.u32 %s179, 1
          %s972 = smul.addr %s971, 8
          %s973 = scalar_lea.vmem [#allocation12], %s972
          %974 = dma.done %s970, 128
        $region80: #{tpu_custom_call.1} parent=75 // pred_fallthru
          _
      $region76: #{tpu_custom_call.1} parent=5 // pred_fallthru
        _
    $region6: #{tpu_custom_call.1} parent=1 // loop_footer
      %s27 = sadd.s32 1, %s23
    $region7: #{tpu_custom_call.1} parent=1 // loop_footer_branch
      %22 = sbr.rel target = $region3
    $region8: #{tpu_custom_call.1} parent=1 // loop_exit
      _
    %975 = vsyncpa [#allocation4], 1
    %s976 = scalar_lea.sflag [#allocation4], 1
    %977 = vsyncpa %s976, 1
    %978 = vsyncpa [#allocation7], 1
    %s979 = scalar_lea.sflag [#allocation7], 1
    %980 = vsyncpa %s979, 1
    %981 = vsyncpa [#allocation10], 1
    %s982 = scalar_lea.sflag [#allocation10], 1
    %983 = vsyncpa %s982, 1
    %984 = vsyncpa [#allocation5], 1
    %s985 = scalar_lea.sflag [#allocation5], 1
    %986 = vsyncpa %s985, 1

</llo_original>
